<compile_context>
chip_gen: v5e
topology: v5e:2x2
jax: 0.10.0
libtpu: 0.0.40
codegen_flags: <defaults>
</compile_context>

<pallas_src>
import math

import jax
import jax.numpy as jnp
from jax.experimental import pallas as pl
from jax.experimental.pallas import tpu as pltpu


def _make_stack_kernel(num_inputs):
    """Copy each (1, tq, C) input block into major-axis slot i of the
    (1, n, tq, C) output block.  All stores are full unmasked tiles."""

    def kernel(*refs):
        out_ref = refs[num_inputs]
        for i in range(num_inputs):        # static unroll, n is small & static
            out_ref[:, i, :, :] = refs[i][...]

    return kernel


def stack_pallas(xs, dim):
    """Equivalent of torch.stack(list_of_tensors, dim=dim)."""
    xs = list(xs)
    assert len(xs) >= 1, "stack needs at least one tensor"
    base = xs[0].shape
    dtype = xs[0].dtype
    for x in xs:
        assert x.shape == base and x.dtype == dtype, \
            "torch.stack requires identical shapes/dtypes"

    n = len(xs)
    out_ndim = len(base) + 1
    d = dim % out_ndim  # torch-style negative-dim normalization
    out_shape = base[:d] + (n,) + base[d:]

    # Minor-dim stacking (new axis lands in the last two output dims) demands a
    # sublane/lane-interleaved layout; a single fused XLA pass is the right tool
    # there (a kernel + transpose would double HBM traffic).
    # TODO(synk): in-kernel sublane interleave for dim == out_ndim - 2.
    if d > out_ndim - 3 or any(s == 0 for s in out_shape):
        return jnp.stack(xs, axis=d)

    itemsize = jnp.dtype(dtype).itemsize
    P = math.prod(base[:d])        # dims before the stack axis (>= 1)
    C = base[-1]                   # lane dim, kept whole (lane-dense stores)
    Q = math.prod(base[d:-1])      # sublane-tiled dim (>= 1, since d <= ndim-3)

    # VMEM budget: (n input blocks + 1 output block(= n input blocks)) x 2
    # pipeline buffers ~= 4*n*in_block_bytes; keep the total ~<= 13 MiB so it
    # fits the scoped-VMEM default on every generation (16/32/32 MiB).
    budget_total = 13 * 1024 * 1024
    in_block_budget = max(budget_total // (4 * n), 8 * C * itemsize)
    max_rows = max(8, (in_block_budget // (C * itemsize)) // 8 * 8)
    tq = Q if Q <= max_rows else min(max_rows, 2048)   # multiple of 8 or full

    grid = (P, pl.cdiv(Q, tq))

    # Contiguous dim regrouping only (free) — no transpose, no data movement.
    xs3 = [x.reshape(P, Q, C) for x in xs]

    out = pl.pallas_call(
        _make_stack_kernel(n),
        out_shape=jax.ShapeDtypeStruct((P, n, Q, C), dtype),
        grid=grid,
        in_specs=[pl.BlockSpec((1, tq, C), lambda p, q: (p, q, 0))] * n,
        out_specs=pl.BlockSpec((1, n, tq, C), lambda p, q: (p, 0, q, 0)),
        compiler_params=pltpu.CompilerParams(
            dimension_semantics=("parallel", "parallel"),
            vmem_limit_bytes=32 * 1024 * 1024,
        ),
    )(*xs3)

    # Contiguous dim regrouping back to the torch.stack layout (free).
    return out.reshape(out_shape)


if __name__ == "__main__":
    # Stack(data={'dim': 1}) applied to a list of 3 tensors of shape (2, 8, 128).
    N, SHAPE, DIM = 3, (2, 8, 128), 1

    key = jax.random.PRNGKey(0)
    keys = jax.random.split(key, N)
    xs = [jax.random.normal(k, SHAPE, jnp.float32) for k in keys]

    out = jax.block_until_ready(stack_pallas(xs, DIM))
    ref = jnp.stack(xs, axis=DIM)
    assert out.shape == ref.shape == (2, N, 8, 128)
    assert bool(jnp.array_equal(out, ref))

    # dim=0 also exercises the Pallas path; dim=-1 exercises the minor-dim
    # fallback (single XLA pass, per review guidance).
    for d in (0, -1):
        o = jax.block_until_ready(stack_pallas(xs, d))
        assert bool(jnp.array_equal(o, jnp.stack(xs, axis=d)))

    print("KERNEL_OK")
</pallas_src>

<mosaic_0001>
module attributes {stable_mosaic.version = 11 : i64} {
  func.func @kernel(%arg0: i32, %arg1: i32, %arg2: memref<1x8x128xf32, #tpu.memory_space<vmem>>, %arg3: memref<1x8x128xf32, #tpu.memory_space<vmem>>, %arg4: memref<1x8x128xf32, #tpu.memory_space<vmem>>, %arg5: memref<1x3x8x128xf32, #tpu.memory_space<vmem>>) attributes {dimension_semantics = [#tpu.dimension_semantics<parallel>, #tpu.dimension_semantics<parallel>], iteration_bounds = array<i64: 2, 1>, scalar_prefetch = 0 : i64, scratch_operands = 0 : i64, tpu.core_type = #tpu.core_type<tc>, window_params = [{transform_indices = @transform_0, window_bounds = array<i64: 1, 8, 128>}, {transform_indices = @transform_1, window_bounds = array<i64: 1, 8, 128>}, {transform_indices = @transform_2, window_bounds = array<i64: 1, 8, 128>}, {transform_indices = @transform_3, window_bounds = array<i64: 1, 3, 8, 128>}]} {
    %c0 = arith.constant 0 : index
    %c0_0 = arith.constant 0 : index
    %c0_1 = arith.constant 0 : index
    %0 = vector.load %arg2[%c0, %c0_0, %c0_1] : memref<1x8x128xf32, #tpu.memory_space<vmem>>, vector<1x8x128xf32>
    %c0_2 = arith.constant 0 : index
    %c0_3 = arith.constant 0 : index
    %c0_4 = arith.constant 0 : index
    %c0_5 = arith.constant 0 : index
    %1 = vector.load %arg5[%c0_2, %c0_3, %c0_4, %c0_5] : memref<1x3x8x128xf32, #tpu.memory_space<vmem>>, vector<1x1x8x128xf32>
    %2 = vector.shape_cast %1 : vector<1x1x8x128xf32> to vector<1x8x128xf32>
    %3 = vector.shape_cast %0 : vector<1x8x128xf32> to vector<1x1x8x128xf32>
    tpu.vector_store %arg5[%c0_2, %c0_3, %c0_4, %c0_5], %3 {strides = array<i32>} : memref<1x3x8x128xf32, #tpu.memory_space<vmem>>, vector<1x1x8x128xf32>,
    %c0_6 = arith.constant 0 : index
    %c0_7 = arith.constant 0 : index
    %c0_8 = arith.constant 0 : index
    %4 = vector.load %arg3[%c0_6, %c0_7, %c0_8] : memref<1x8x128xf32, #tpu.memory_space<vmem>>, vector<1x8x128xf32>
    %c0_9 = arith.constant 0 : index
    %c1 = arith.constant 1 : index
    %c0_10 = arith.constant 0 : index
    %c0_11 = arith.constant 0 : index
    %5 = vector.load %arg5[%c0_9, %c1, %c0_10, %c0_11] : memref<1x3x8x128xf32, #tpu.memory_space<vmem>>, vector<1x1x8x128xf32>
    %6 = vector.shape_cast %5 : vector<1x1x8x128xf32> to vector<1x8x128xf32>
    %7 = vector.shape_cast %4 : vector<1x8x128xf32> to vector<1x1x8x128xf32>
    tpu.vector_store %arg5[%c0_9, %c1, %c0_10, %c0_11], %7 {strides = array<i32>} : memref<1x3x8x128xf32, #tpu.memory_space<vmem>>, vector<1x1x8x128xf32>,
    %c0_12 = arith.constant 0 : index
    %c0_13 = arith.constant 0 : index
    %c0_14 = arith.constant 0 : index
    %8 = vector.load %arg4[%c0_12, %c0_13, %c0_14] : memref<1x8x128xf32, #tpu.memory_space<vmem>>, vector<1x8x128xf32>
    %c0_15 = arith.constant 0 : index
    %c2 = arith.constant 2 : index
    %c0_16 = arith.constant 0 : index
    %c0_17 = arith.constant 0 : index
    %9 = vector.load %arg5[%c0_15, %c2, %c0_16, %c0_17] : memref<1x3x8x128xf32, #tpu.memory_space<vmem>>, vector<1x1x8x128xf32>
    %10 = vector.shape_cast %9 : vector<1x1x8x128xf32> to vector<1x8x128xf32>
    %11 = vector.shape_cast %8 : vector<1x8x128xf32> to vector<1x1x8x128xf32>
    tpu.vector_store %arg5[%c0_15, %c2, %c0_16, %c0_17], %11 {strides = array<i32>} : memref<1x3x8x128xf32, #tpu.memory_space<vmem>>, vector<1x1x8x128xf32>,
    return
  }
  func.func @transform_0(%arg0: i32, %arg1: i32) -> (i32, i32, i32) {
    %c0_i32 = arith.constant 0 : i32
    %c0_i32_0 = arith.constant 0 : i32
    return %arg0, %arg1, %c0_i32 : i32, i32, i32
  }
  func.func @transform_1(%arg0: i32, %arg1: i32) -> (i32, i32, i32) {
    %c0_i32 = arith.constant 0 : i32
    %c0_i32_0 = arith.constant 0 : i32
    return %arg0, %arg1, %c0_i32 : i32, i32, i32
  }
  func.func @transform_2(%arg0: i32, %arg1: i32) -> (i32, i32, i32) {
    %c0_i32 = arith.constant 0 : i32
    %c0_i32_0 = arith.constant 0 : i32
    return %arg0, %arg1, %c0_i32 : i32, i32, i32
  }
  func.func @transform_3(%arg0: i32, %arg1: i32) -> (i32, i32, i32, i32) {
    %c0_i32 = arith.constant 0 : i32
    %c0_i32_0 = arith.constant 0 : i32
    %c0_i32_1 = arith.constant 0 : i32
    return %arg0, %c0_i32, %arg1, %c0_i32_0 : i32, i32, i32, i32
  }
}

</mosaic_0001>

<llo_original>
// kernel: tpu_custom_call.1
$region0: #{tpu_custom_call.1}
  #allocation0 [shape = 'u32[]', space=smem, size = 0x4, offset = 0x4, fixed_abs, tag = 'smem constant byte address 0x4 - core index']
  #allocation1 [shape = 'u32[72,128]{1,0:T(1,128)}', space=vmem, size = 0x9000, scoped, tag = 'internal scratch']
  %s0 = inlined_call_operand.hbm [shape: f32[2,8,128], index: 0, kind: input, shape index: {}]
  %s1 = inlined_call_operand.hbm [shape: f32[2,8,128], index: 1, kind: input, shape index: {}]
  %s2 = inlined_call_operand.hbm [shape: f32[2,8,128], index: 2, kind: input, shape index: {}]
  %s3 = inlined_call_operand.hbm [shape: f32[2,3,8,128], index: 3, kind: output, shape index: {}]
  %s4 = sld [smem:[#allocation0]]
  $region57: #{tpu_custom_call.1} parent=0
    _
  %s6 = ssub.s32 1, %s4
  %s7 = scalar_select 0, %s6, %s4
  $region1: #{tpu_custom_call.1} parent=0
    #allocation2 [shape = 'u8[8192]{0}', space=vmem, size = 0x2000, scoped, tag = 'input window, operand 0']
    #allocation3 [shape = 's32[2]{0}', space=sflag, size = 0x8, scoped, tag = 'scoped memory for tpu_custom_call.1']
    #allocation4 [shape = 's32[2]{0}', space=sflag, size = 0x8, scoped, tag = 'scoped memory for tpu_custom_call.1']
    #allocation5 [shape = 'u8[8192]{0}', space=vmem, size = 0x2000, scoped, tag = 'input window, operand 1']
    #allocation6 [shape = 's32[2]{0}', space=sflag, size = 0x8, scoped, tag = 'scoped memory for tpu_custom_call.1']
    #allocation7 [shape = 'u8[8192]{0}', space=vmem, size = 0x2000, scoped, tag = 'input window, operand 2']
    #allocation8 [shape = 'u8[24576]{0}', space=vmem, size = 0x6000, scoped, tag = 'output window, operand 0']
    %8 = vsyncpa [#allocation3], 0
    %s9 = scalar_lea.sflag [#allocation3], 1
    %10 = vsyncpa %s9, 0
    %11 = vsyncpa [#allocation6], 0
    %s12 = scalar_lea.sflag [#allocation6], 1
    %13 = vsyncpa %s12, 0
    %14 = vsyncpa [#allocation4], 0
    %s15 = scalar_lea.sflag [#allocation4], 1
    %16 = vsyncpa %s15, 0
    loop: start=0, step=1, limit=4
    $region2: #{tpu_custom_call.1} parent=1 // loop_pre_header
      _
    $region3: #{tpu_custom_call.1} parent=1 // loop_header
      %s18 = sphi 0, %s22
      %p19 = scmp.ge.s32.totalorder %s18, 4
      %s25 = sphi 0, %s37
      %s26 = sphi 0, %s33
      %s27 = sphi 0, %s25
      %s28 = sphi 0, %s26
      %s29 = sphi 0, %s27
      %s30 = sphi 0, %s28
      %s42 = sphi 0, %s44
      %s45 = sphi 0, %s42
      %s46 = sphi 0, %s45
      %s62 = sphi 0, %s46
      %s70 = sphi 0, %s72
      %s73 = sphi 0, %s70
      %s74 = sphi 0, %s73
      %s90 = sphi 0, %s74
      %s98 = sphi 0, %s100
      %s101 = sphi 0, %s98
      %s102 = sphi 0, %s101
      %s118 = sphi 0, %s102
      %s126 = sphi 0, %s128
      %s129 = sphi 0, %s126
      %s130 = sphi 0, %s129
      %s146 = sphi 0, %s130
    $region4: #{tpu_custom_call.1} parent=1 // loop_header_branch
      %21 = sbr.rel (%p19) target = $region8
    $region5: #{tpu_custom_call.1} parent=1 // loop_body
      %s23 = ssub.s32 %s18, 1
      %s24 = ssub.s32 %s18, 2
      %s31 = sadd.s32 1, %s26
      %p32 = scmp.ge.s32.totalorder %s31, 1
      %s33 = scalar_select %p32, 0, %s31
      %s34 = sadd.s32 1, %s25
      %s35 = scalar_select %p32, %s34, %s25
      %p36 = scmp.ge.s32.totalorder %s35, 2
      %s37 = scalar_select %p36, 0, %s35
      %s38 = ssub.s32 %s25, %s37
      %s39 = ssub.s32 %s26, %s33
      %s40 = sor.u32 %s38, %s39
      %p41 = scmp.eq.s32.totalorder %s40, 0
      %s43 = sadd.s32 %s42, 1
      %s44 = scalar_select %p41, %s42, %s43
      %p47 = pneg %p41
      %p48 = scmp.eq.s32.totalorder %s18, 1
      %p49 = por %p47, %p48
      %p50 = scmp.ne.s32.totalorder %s42, %s45
      %p51 = scmp.eq.s32.totalorder %s18, 0
      %p52 = por %p50, %p51
      %p53 = scmp.ne.s32.totalorder %s42, %s45
      %p54 = scmp.eq.s32.totalorder %s23, 1
      %p55 = por %p53, %p54
      %p56 = scmp.ne.s32.totalorder %s45, %s46
      %p57 = scmp.eq.s32.totalorder %s23, 0
      %p58 = por %p56, %p57
      %p59 = scmp.ne.s32.totalorder %s45, %s46
      %p60 = scmp.eq.s32.totalorder %s24, 1
      %p61 = por %p59, %p60
      %p63 = scmp.ne.s32.totalorder %s46, %s62
      %p64 = scmp.eq.s32.totalorder %s24, 0
      %p65 = por %p63, %p64
      %s66 = ssub.s32 %s25, %s37
      %s67 = ssub.s32 %s26, %s33
      %s68 = sor.u32 %s66, %s67
      %p69 = scmp.eq.s32.totalorder %s68, 0
      %s71 = sadd.s32 %s70, 1
      %s72 = scalar_select %p69, %s70, %s71
      %p75 = pneg %p69
      %p76 = scmp.eq.s32.totalorder %s18, 1
      %p77 = por %p75, %p76
      %p78 = scmp.ne.s32.totalorder %s70, %s73
      %p79 = scmp.eq.s32.totalorder %s18, 0
      %p80 = por %p78, %p79
      %p81 = scmp.ne.s32.totalorder %s70, %s73
      %p82 = scmp.eq.s32.totalorder %s23, 1
      %p83 = por %p81, %p82
      %p84 = scmp.ne.s32.totalorder %s73, %s74
      %p85 = scmp.eq.s32.totalorder %s23, 0
      %p86 = por %p84, %p85
      %p87 = scmp.ne.s32.totalorder %s73, %s74
      %p88 = scmp.eq.s32.totalorder %s24, 1
      %p89 = por %p87, %p88
      %p91 = scmp.ne.s32.totalorder %s74, %s90
      %p92 = scmp.eq.s32.totalorder %s24, 0
      %p93 = por %p91, %p92
      %s94 = ssub.s32 %s25, %s37
      %s95 = ssub.s32 %s26, %s33
      %s96 = sor.u32 %s94, %s95
      %p97 = scmp.eq.s32.totalorder %s96, 0
      %s99 = sadd.s32 %s98, 1
      %s100 = scalar_select %p97, %s98, %s99
      %p103 = pneg %p97
      %p104 = scmp.eq.s32.totalorder %s18, 1
      %p105 = por %p103, %p104
      %p106 = scmp.ne.s32.totalorder %s98, %s101
      %p107 = scmp.eq.s32.totalorder %s18, 0
      %p108 = por %p106, %p107
      %p109 = scmp.ne.s32.totalorder %s98, %s101
      %p110 = scmp.eq.s32.totalorder %s23, 1
      %p111 = por %p109, %p110
      %p112 = scmp.ne.s32.totalorder %s101, %s102
      %p113 = scmp.eq.s32.totalorder %s23, 0
      %p114 = por %p112, %p113
      %p115 = scmp.ne.s32.totalorder %s101, %s102
      %p116 = scmp.eq.s32.totalorder %s24, 1
      %p117 = por %p115, %p116
      %p119 = scmp.ne.s32.totalorder %s102, %s118
      %p120 = scmp.eq.s32.totalorder %s24, 0
      %p121 = por %p119, %p120
      %s122 = ssub.s32 %s25, %s37
      %s123 = ssub.s32 %s26, %s33
      %s124 = sor.u32 %s122, %s123
      %p125 = scmp.eq.s32.totalorder %s124, 0
      %s127 = sadd.s32 %s126, 1
      %s128 = scalar_select %p125, %s126, %s127
      %p131 = pneg %p125
      %p132 = scmp.eq.s32.totalorder %s18, 1
      %p133 = por %p131, %p132
      %p134 = scmp.ne.s32.totalorder %s126, %s129
      %p135 = scmp.eq.s32.totalorder %s18, 0
      %p136 = por %p134, %p135
      %p137 = scmp.ne.s32.totalorder %s126, %s129
      %p138 = scmp.eq.s32.totalorder %s23, 1
      %p139 = por %p137, %p138
      %p140 = scmp.ne.s32.totalorder %s129, %s130
      %p141 = scmp.eq.s32.totalorder %s23, 0
      %p142 = por %p140, %p141
      %p143 = scmp.ne.s32.totalorder %s129, %s130
      %p144 = scmp.eq.s32.totalorder %s24, 1
      %p145 = por %p143, %p144
      %p147 = scmp.ne.s32.totalorder %s130, %s146
      %p148 = scmp.eq.s32.totalorder %s24, 0
      %p149 = por %p147, %p148
      %p150 = scmp.le.s32.totalorder 1, %s18
      %p151 = scmp.lt.s32.totalorder %s18, 3
      %p152 = pnand %p150, %p151
      %p153 = pneg %p152
      // Predicated region
      $region9: #{tpu_custom_call.1} parent=5 // pred_check
        _
      $region10: #{tpu_custom_call.1} parent=5 // pred_check_branch
        %155 = sbr.rel (%p152) target = $region12
      $region11: #{tpu_custom_call.1} parent=5 // pred_region
        %s156 = ssub.s32 %s18, 1
      $region12: #{tpu_custom_call.1} parent=5 // pred_fallthru
        _
      %p157 = scmp.lt.s32.totalorder %s18, 2
      // Predicated region
      $region13: #{tpu_custom_call.1} parent=5 // pred_check
        %p158 = pneg %p157
      $region14: #{tpu_custom_call.1} parent=5 // pred_check_branch
        %160 = sbr.rel (%p158) target = $region16
      $region15: #{tpu_custom_call.1} parent=5 // pred_region
        // Predicated region
        $region17: #{tpu_custom_call.1} parent=15 // pred_check
          %p161 = pneg %p52
        $region18: #{tpu_custom_call.1} parent=15 // pred_check_branch
          %163 = sbr.rel (%p161) target = $region20
        $region19: #{tpu_custom_call.1} parent=15 // pred_region
          %s164 = sand.u32 %s42, 1
          %s165 = scalar_lea.sflag [#allocation3], %s164
          %s166 = sand.u32 %s42, 1
          %s167 = smul.addr %s166, 8
          %s168 = scalar_lea.vmem [#allocation2], %s167
          %170 = vsyncadd %s165, 0
          %s171 = sadd.s32 %s26, %s25
          %s172 = smul.addr %s171, 8
          %s173 = scalar_lea.hbm %s0, %s172
          %s175 = sshll.u32 %s173, 4
          %s176 = int_to_ptr.hbm [resolvable:$true] %s175
          %s177 = sshll.u32 %s168, 4
          %s178 = int_to_ptr.vmem [resolvable:$true] %s177
          %180 = dma.hbm_to_vmem [thread:$0]  %s176, 128, %s178, %s165
        $region20: #{tpu_custom_call.1} parent=15 // pred_fallthru
          _
        // Predicated region
        $region21: #{tpu_custom_call.1} parent=15 // pred_check
          %p181 = pneg %p80
        $region22: #{tpu_custom_call.1} parent=15 // pred_check_branch
          %183 = sbr.rel (%p181) target = $region24
        $region23: #{tpu_custom_call.1} parent=15 // pred_region
          %s184 = sand.u32 %s18, 1
          %s185 = scalar_lea.sflag [#allocation6], %s184
          %s186 = sand.u32 %s70, 1
          %s187 = smul.addr %s186, 8
          %s188 = scalar_lea.vmem [#allocation5], %s187
          %190 = vsyncadd %s185, 0
          %s191 = sadd.s32 %s26, %s25
          %s192 = smul.addr %s191, 8
          %s193 = scalar_lea.hbm %s1, %s192
          %s195 = sshll.u32 %s193, 4
          %s196 = int_to_ptr.hbm [resolvable:$true] %s195
          %s197 = sshll.u32 %s188, 4
          %s198 = int_to_ptr.vmem [resolvable:$true] %s197
          %200 = dma.hbm_to_vmem [thread:$0]  %s196, 128, %s198, %s185
        $region24: #{tpu_custom_call.1} parent=15 // pred_fallthru
          _
        // Predicated region
        $region25: #{tpu_custom_call.1} parent=15 // pred_check
          %p201 = pneg %p108
        $region26: #{tpu_custom_call.1} parent=15 // pred_check_branch
          %203 = sbr.rel (%p201) target = $region28
        $region27: #{tpu_custom_call.1} parent=15 // pred_region
          %s204 = sand.u32 %s18, 1
          %s205 = scalar_lea.sflag [#allocation6], %s204
          %s206 = sand.u32 %s98, 1
          %s207 = smul.addr %s206, 8
          %s208 = scalar_lea.vmem [#allocation7], %s207
          %210 = vsyncadd %s205, 0
          %s211 = sadd.s32 %s26, %s25
          %s212 = smul.addr %s211, 8
          %s213 = scalar_lea.hbm %s2, %s212
          %s215 = sshll.u32 %s213, 4
          %s216 = int_to_ptr.hbm [resolvable:$true] %s215
          %s217 = sshll.u32 %s208, 4
          %s218 = int_to_ptr.vmem [resolvable:$true] %s217
          %220 = dma.hbm_to_vmem [thread:$0]  %s216, 128, %s218, %s205
        $region28: #{tpu_custom_call.1} parent=15 // pred_fallthru
          _
      $region16: #{tpu_custom_call.1} parent=5 // pred_fallthru
        _
      %p221 = scmp.le.s32.totalorder 1, %s18
      %p222 = scmp.lt.s32.totalorder %s18, 3
      %p223 = pnand %p221, %p222
      %p224 = pneg %p223
      // Predicated region
      $region29: #{tpu_custom_call.1} parent=5 // pred_check
        _
      $region30: #{tpu_custom_call.1} parent=5 // pred_check_branch
        %226 = sbr.rel (%p223) target = $region32
      $region31: #{tpu_custom_call.1} parent=5 // pred_region
        %s227 = ssub.s32 %s18, 1
        %s228 = sand.u32 %s45, 1
        %s229 = scalar_lea.sflag [#allocation3], %s228
        %s230 = sand.u32 %s45, 1
        %s231 = smul.addr %s230, 8
        %s232 = scalar_lea.vmem [#allocation2], %s231
        // Predicated region
        $region33: #{tpu_custom_call.1} parent=31 // pred_check
          %p233 = pneg %p58
        $region34: #{tpu_custom_call.1} parent=31 // pred_check_branch
          %235 = sbr.rel (%p233) target = $region36
        $region35: #{tpu_custom_call.1} parent=31 // pred_region
          %237 = dma.done %s229, 128
        $region36: #{tpu_custom_call.1} parent=31 // pred_fallthru
          _
        %s238 = sand.u32 %s23, 1
        %s239 = scalar_lea.sflag [#allocation6], %s238
        %s240 = sand.u32 %s73, 1
        %s241 = smul.addr %s240, 8
        %s242 = scalar_lea.vmem [#allocation5], %s241
        // Predicated region
        $region37: #{tpu_custom_call.1} parent=31 // pred_check
          %p243 = pneg %p86
        $region38: #{tpu_custom_call.1} parent=31 // pred_check_branch
          %245 = sbr.rel (%p243) target = $region40
        $region39: #{tpu_custom_call.1} parent=31 // pred_region
          %247 = dma.done %s239, 128
        $region40: #{tpu_custom_call.1} parent=31 // pred_fallthru
          _
        %s248 = sand.u32 %s23, 1
        %s249 = scalar_lea.sflag [#allocation6], %s248
        %s250 = sand.u32 %s101, 1
        %s251 = smul.addr %s250, 8
        %s252 = scalar_lea.vmem [#allocation7], %s251
        // Predicated region
        $region41: #{tpu_custom_call.1} parent=31 // pred_check
          %p253 = pneg %p114
        $region42: #{tpu_custom_call.1} parent=31 // pred_check_branch
          %255 = sbr.rel (%p253) target = $region44
        $region43: #{tpu_custom_call.1} parent=31 // pred_region
          %257 = dma.done %s249, 128
        $region44: #{tpu_custom_call.1} parent=31 // pred_fallthru
          _
        %s258 = sand.u32 %s45, 1
        %s259 = scalar_lea.sflag [#allocation3], %s258
        %s260 = sand.u32 %s45, 1
        %s261 = smul.addr %s260, 8
        %s262 = scalar_lea.vmem [#allocation2], %s261
        %p263 = pneg %p58
        %p264 = pneg %p55
        %s265 = sand.u32 %s23, 1
        %s266 = scalar_lea.sflag [#allocation6], %s265
        %s267 = sand.u32 %s73, 1
        %s268 = smul.addr %s267, 8
        %s269 = scalar_lea.vmem [#allocation5], %s268
        %p270 = pneg %p86
        %p271 = pneg %p83
        %s272 = sand.u32 %s23, 1
        %s273 = scalar_lea.sflag [#allocation6], %s272
        %s274 = sand.u32 %s101, 1
        %s275 = smul.addr %s274, 8
        %s276 = scalar_lea.vmem [#allocation7], %s275
        %p277 = pneg %p114
        %p278 = pneg %p111
        %p279 = pneg %p142
        %p280 = pneg %p139
        %s281 = sand.u32 %s129, 1
        %s282 = scalar_lea.sflag [#allocation4], %s281
        %s283 = sand.u32 %s129, 1
        %s284 = smul.addr %s283, 24
        %s285 = scalar_lea.vmem [#allocation8], %s284
        %v286 = vld [vmem:[%s232] sm:$0xff]
        %287 = vst [vmem:[%s285] sm:$0xff] %v286
        %v288 = vld [vmem:[%s242] sm:$0xff]
        %s289 = scalar_lea.vmem %s285, 8 [#allocation8]
        %290 = vst [vmem:[%s289] sm:$0xff] %v288
        %v291 = vld [vmem:[%s252] sm:$0xff]
        %s292 = scalar_lea.vmem %s285, 16 [#allocation8]
        %293 = vst [vmem:[%s292] sm:$0xff] %v291
        %s294 = sand.u32 %s129, 1
        %s295 = scalar_lea.sflag [#allocation4], %s294
        %s296 = sand.u32 %s129, 1
        %s297 = smul.addr %s296, 24
        %s298 = scalar_lea.vmem [#allocation8], %s297
        // Predicated region
        $region45: #{tpu_custom_call.1} parent=31 // pred_check
          %p299 = pneg %p139
        $region46: #{tpu_custom_call.1} parent=31 // pred_check_branch
          %301 = sbr.rel (%p299) target = $region48
        $region47: #{tpu_custom_call.1} parent=31 // pred_region
          %303 = vsyncadd %s295, 0
          %s304 = smul.addr %s27, 3
          %s305 = sadd.s32 %s28, %s304
          %s306 = smul.addr %s305, 8
          %s307 = scalar_lea.hbm %s3, %s306
          %s308 = sshll.u32 %s298, 4
          %s309 = int_to_ptr.vmem [resolvable:$true] %s308
          %s310 = sshll.u32 %s307, 4
          %s311 = int_to_ptr.hbm [resolvable:$true] %s310
          %316 = dma.vmem_to_hbm [thread:$0]  %s309, 384, %s311, %s295, 128, 128, 8
        $region48: #{tpu_custom_call.1} parent=31 // pred_fallthru
          _
      $region32: #{tpu_custom_call.1} parent=5 // pred_fallthru
        _
      %p317 = scmp.le.s32.totalorder 2, %s18
      // Predicated region
      $region49: #{tpu_custom_call.1} parent=5 // pred_check
        %p318 = pneg %p317
      $region50: #{tpu_custom_call.1} parent=5 // pred_check_branch
        %320 = sbr.rel (%p318) target = $region52
      $region51: #{tpu_custom_call.1} parent=5 // pred_region
        %s321 = ssub.s32 %s18, 2
        // Predicated region
        $region53: #{tpu_custom_call.1} parent=51 // pred_check
          %p322 = pneg %p145
        $region54: #{tpu_custom_call.1} parent=51 // pred_check_branch
          %324 = sbr.rel (%p322) target = $region56
        $region55: #{tpu_custom_call.1} parent=51 // pred_region
          %s325 = sand.u32 %s130, 1
          %s326 = scalar_lea.sflag [#allocation4], %s325
          %s327 = sand.u32 %s130, 1
          %s328 = smul.addr %s327, 24
          %s329 = scalar_lea.vmem [#allocation8], %s328
          %331 = dma.done %s326, 384
        $region56: #{tpu_custom_call.1} parent=51 // pred_fallthru
          _
      $region52: #{tpu_custom_call.1} parent=5 // pred_fallthru
        _
    $region6: #{tpu_custom_call.1} parent=1 // loop_footer
      %s22 = sadd.s32 1, %s18
    $region7: #{tpu_custom_call.1} parent=1 // loop_footer_branch
      %17 = sbr.rel target = $region3
    $region8: #{tpu_custom_call.1} parent=1 // loop_exit
      _
    %332 = vsyncpa [#allocation3], 1
    %s333 = scalar_lea.sflag [#allocation3], 1
    %334 = vsyncpa %s333, 1
    %335 = vsyncpa [#allocation6], 1
    %s336 = scalar_lea.sflag [#allocation6], 1
    %337 = vsyncpa %s336, 1
    %338 = vsyncpa [#allocation4], 1
    %s339 = scalar_lea.sflag [#allocation4], 1
    %340 = vsyncpa %s339, 1

</llo_original>
